<compile_context>
chip_gen: v7x
topology: tpu7x:2x2x1
jax: 0.10.0
libtpu: 0.0.40
codegen_flags: <defaults>
</compile_context>

<pallas_src>
import jax
import jax.numpy as jnp
import numpy as np
from jax import lax
from jax.experimental import pallas as pl
from jax.experimental.pallas import tpu as pltpu


def _round_up(x, m):
    return ((x + m - 1) // m) * m


def _contrastive_loss_kernel(za_ref, zb_ref, part_ref, acc_ref):
    """One grid step.

    za_ref:   (tm, d_pad) tile of z_a
    zb_ref:   (tm, tdj)   tile of z_b
    part_ref: (1, 8, 128) f32 per-j partials output block
              lane 0 -> sum(A_block^2), lane 1 -> sum(diag A), lane 2 -> sum(diag(A)^2)
    acc_ref:  (d_pad, tdj) f32 accumulator scratch
    """
    j = pl.program_id(0)           # output-column block
    k = pl.program_id(1)           # observation (reduction) block
    nk = pl.num_programs(1)
    tdj = acc_ref.shape[1]

    # A[:, j-block] += za_blk.T @ zb_blk (contract over observation axis) on the MXU.
    # Inputs stay in their storage dtype (bf16 feeds the MXU natively); acc stays f32.
    # TODO(synk): verify via pl.lower_as_mlir that the transposed-LHS contraction does
    # not emit a per-step XLU transpose; if it does, pre-transpose z_a once in the wrapper.
    prod = lax.dot_general(
        za_ref[...], zb_ref[...],
        dimension_numbers=(((0,), (0,)), ((), ())),
        preferred_element_type=jnp.float32,
    )

    @pl.when(k == 0)
    def _store_first():
        acc_ref[...] = prod

    @pl.when(k > 0)
    def _accumulate():
        acc_ref[...] += prod

    @pl.when(k == nk - 1)
    def _finalize_block():
        a = acc_ref[...]
        total = jnp.sum(a * a)
        # Diagonal statistics only touch the (tdj, tdj) sub-block containing the
        # global diagonal of A for this column block.
        start = pl.multiple_of(j * tdj, 128)
        db = acc_ref[pl.ds(start, tdj), :]
        row = lax.broadcasted_iota(jnp.int32, (tdj, tdj), 0)
        col = lax.broadcasted_iota(jnp.int32, (tdj, tdj), 1)
        eye = (row == col).astype(jnp.float32)
        diag_sum = jnp.sum(db * eye)
        diag_sq = jnp.sum(db * db * eye)
        lane = lax.broadcasted_iota(jnp.int32, (1, 8, 128), 2)
        part_ref[...] = jnp.where(
            lane == 0, total,
            jnp.where(lane == 1, diag_sum,
                      jnp.where(lane == 2, diag_sq, jnp.float32(0.0))))


def _aggregate_groups(z_a, z_b, groups):
    """Ragged group aggregation as cheap JAX glue (no dense one-hot matmul):
       agg_a[i] = sum(z_a[group_i]); agg_b[i] = sum(z_b[group_i]) / len(group_i)."""
    n = z_a.shape[0]
    num_groups = len(groups)
    seg_ids = np.empty((n,), dtype=np.int32)
    inv_sizes = np.empty((num_groups,), dtype=np.float32)
    for i, group in enumerate(groups):
        inv_sizes[i] = 1.0 / len(group)
        for idx in group:
            seg_ids[idx] = i
    seg_ids = jnp.asarray(seg_ids)
    inv_sizes = jnp.asarray(inv_sizes).astype(z_b.dtype)
    agg_a = jax.ops.segment_sum(z_a, seg_ids, num_segments=num_groups)
    agg_b = jax.ops.segment_sum(z_b, seg_ids, num_segments=num_groups) * inv_sizes[:, None]
    return agg_a, agg_b


def contrastive_loss(z_a, z_b, groups=None, coefficient=0.01, cast_inputs_to_bf16=False):
    assert z_a.ndim == 2
    assert z_b.ndim == 2
    assert z_a.shape == z_b.shape
    n, d = z_a.shape

    if groups is not None:
        assert sum(len(g) for g in groups) == n, "every observation must be accounted for"
        z_a, z_b = _aggregate_groups(z_a, z_b, groups)

    if cast_inputs_to_bf16:
        # Opt-in: halves HBM traffic and feeds the MXU at full bf16 rate;
        # accumulation and the finalize stay in f32.
        z_a = z_a.astype(jnp.bfloat16)
        z_b = z_b.astype(jnp.bfloat16)

    m = z_a.shape[0]
    itemsize = jnp.dtype(z_a.dtype).itemsize

    # --- tile-size derivation against the actual chip's VMEM -----------------------
    try:
        vmem_cap = int(pltpu.get_tpu_info().vmem_capacity_bytes)
    except Exception:
        vmem_cap = 64 * 1024 * 1024          # conservative (v7x per-TC)
    budget = int(vmem_cap * 0.75)

    lane_align = 128 if d <= 128 else 256    # 256: full 2x256^2 MXU occupancy (v6e/v7x)
    d_pad = _round_up(d, lane_align)

    row_align = 8 * max(1, 4 // itemsize)    # sublane packing: f32 -> 8, bf16 -> 16
    m_rounded = _round_up(m, row_align)
    min_tm = max(row_align, min(256, m_rounded))

    # tdj must divide d_pad and be a multiple of 128; maximise it first.
    units = d_pad // 128
    tdj_candidates = sorted({q * 128 for q in range(1, units + 1) if units % q == 0},
                            reverse=True)

    def _pick_tm(tdj_):
        avail = budget - d_pad * tdj_ * 4                 # f32 accumulator
        if avail <= 0:
            return None
        tm_fit = avail // (2 * (d_pad + tdj_) * itemsize)  # double-buffered z_a + z_b tiles
        if tm_fit < row_align:
            return None
        if tm_fit >= 256:
            tm_ = (tm_fit // 256) * 256
        else:
            tm_ = (tm_fit // row_align) * row_align
        return int(min(tm_, 2048, m_rounded))

    tdj = None
    tm = None
    for cand in tdj_candidates:
        t = _pick_tm(cand)
        if t is not None and t >= min_tm:
            tdj, tm = cand, t
            break
    if tdj is None:
        # Degenerate fall-back (enormous d_pad): smallest lane-aligned column block.
        tdj = 128
        t = _pick_tm(tdj)
        tm = max(row_align, t if t is not None else row_align)

    m_pad = _round_up(m, tm)
    if (m_pad != m) or (d_pad != d):
        # Zero rows/cols contribute nothing to A = z_a.T @ z_b; loss uses original n, d.
        z_a = jnp.pad(z_a, ((0, m_pad - m), (0, d_pad - d)))
        z_b = jnp.pad(z_b, ((0, m_pad - m), (0, d_pad - d)))

    n_j = d_pad // tdj
    n_k = m_pad // tm

    est = d_pad * tdj * 4 + 2 * tm * (d_pad + tdj) * itemsize
    vmem_limit = None
    if est > 12 * 1024 * 1024:
        vmem_limit = min(int(vmem_cap * 0.9),
                         max(int(est * 1.25) + (4 << 20), 24 << 20))

    parts = pl.pallas_call(
        _contrastive_loss_kernel,
        out_shape=jax.ShapeDtypeStruct((n_j, 8, 128), jnp.float32),
        grid_spec=pltpu.PrefetchScalarGridSpec(
            num_scalar_prefetch=0,
            grid=(n_j, n_k),
            in_specs=[
                pl.BlockSpec((tm, d_pad), lambda j, k: (k, 0)),
                pl.BlockSpec((tm, tdj), lambda j, k: (k, j)),
            ],
            out_specs=pl.BlockSpec((1, 8, 128), lambda j, k: (j, 0, 0)),
            scratch_shapes=[
                pltpu.VMEM((d_pad, tdj), jnp.float32),   # correlation accumulator block
            ],
        ),
        compiler_params=pltpu.CompilerParams(
            dimension_semantics=("parallel", "arbitrary"),
            vmem_limit_bytes=vmem_limit,
        ),
    )(z_a, z_b)

    # Tiny final combine in JAX (3 scalars per j block).
    total = jnp.sum(parts[:, 0, 0])
    diag_sum = jnp.sum(parts[:, 0, 1])
    diag_sq = jnp.sum(parts[:, 0, 2])
    inv_n = jnp.float32(1.0 / n)
    diagonal_loss = diag_sq * inv_n * inv_n - 2.0 * diag_sum * inv_n + jnp.float32(d)
    off_diag_loss = (total - diag_sq) * inv_n * inv_n
    return (diagonal_loss + jnp.float32(coefficient) * off_diag_loss) * inv_n


def _reference_loss(z_a, z_b, groups=None, coefficient=0.01):
    """Pure-JAX reference mirroring the PyTorch forward exactly."""
    n = z_a.shape[0]
    if groups is not None:
        agg_a = jnp.stack([z_a[jnp.asarray(g)].sum(axis=0) for g in groups])
        agg_b = jnp.stack([z_b[jnp.asarray(g)].sum(axis=0) / len(g) for g in groups])
        z_a, z_b = agg_a, agg_b
    c = z_a.T @ z_b / n
    diag_diff = jnp.diagonal(c) - 1.0
    diagonal_loss = jnp.dot(diag_diff, diag_diff)
    mask = 1.0 - jnp.eye(c.shape[0], dtype=c.dtype)
    off = (c * mask).ravel()
    off_loss = jnp.dot(off, off)
    return (diagonal_loss + coefficient * off_loss) / n


if __name__ == "__main__":
    key = jax.random.PRNGKey(0)
    k_a, k_b = jax.random.split(key)

    n_obs, proj_dim = 16, 32
    z_a = jax.random.normal(k_a, (n_obs, proj_dim), dtype=jnp.float32)
    z_b = jax.random.normal(k_b, (n_obs, proj_dim), dtype=jnp.float32)
    # Normalize along the batch dimension (mean 0, std 1), as the docstring assumes.
    z_a = (z_a - z_a.mean(axis=0, keepdims=True)) / (z_a.std(axis=0, keepdims=True) + 1e-6)
    z_b = (z_b - z_b.mean(axis=0, keepdims=True)) / (z_b.std(axis=0, keepdims=True) + 1e-6)

    groups = [[0, 1, 2, 3], [4, 5, 6, 7], [8, 9, 10, 11], [12, 13, 14, 15]]
    coefficient = 0.01

    # Case 1: no groups.
    loss_no_groups = jax.block_until_ready(contrastive_loss(z_a, z_b, None, coefficient))
    ref_no_groups = _reference_loss(z_a, z_b, None, coefficient)
    assert jnp.allclose(loss_no_groups, ref_no_groups, rtol=1e-5, atol=1e-5), (
        loss_no_groups, ref_no_groups)

    # Case 2: with groups.
    loss_groups = jax.block_until_ready(contrastive_loss(z_a, z_b, groups, coefficient))
    ref_groups = _reference_loss(z_a, z_b, groups, coefficient)
    assert jnp.allclose(loss_groups, ref_groups, rtol=1e-5, atol=1e-5), (
        loss_groups, ref_groups)

    print("KERNEL_OK")
</pallas_src>

<mosaic_0001>
module attributes {stable_mosaic.version = 11 : i64} {
  func.func @_contrastive_loss_kernel(%arg0: i32, %arg1: i32, %arg2: memref<16x128xf32, #tpu.memory_space<vmem>>, %arg3: memref<16x128xf32, #tpu.memory_space<vmem>>, %arg4: memref<1x8x128xf32, #tpu.memory_space<vmem>>, %arg5: memref<128x128xf32, #tpu.memory_space<vmem>>) attributes {dimension_semantics = [#tpu.dimension_semantics<parallel>, #tpu.dimension_semantics<arbitrary>], iteration_bounds = array<i64: 1, 1>, scalar_prefetch = 0 : i64, scratch_operands = 1 : i64, tpu.core_type = #tpu.core_type<tc>, window_params = [{transform_indices = @transform_0, window_bounds = array<i64: 16, 128>}, {transform_indices = @transform_1, window_bounds = array<i64: 16, 128>}, {transform_indices = @transform_2, window_bounds = array<i64: 1, 8, 128>}]} {
    %c0 = arith.constant 0 : index
    %c0_0 = arith.constant 0 : index
    %0 = vector.load %arg2[%c0, %c0_0] : memref<16x128xf32, #tpu.memory_space<vmem>>, vector<16x128xf32>
    %c0_1 = arith.constant 0 : index
    %c0_2 = arith.constant 0 : index
    %1 = vector.load %arg3[%c0_1, %c0_2] : memref<16x128xf32, #tpu.memory_space<vmem>>, vector<16x128xf32>
    %cst = arith.constant dense<0.000000e+00> : vector<128x128xf32>
    %2 = tpu.matmul %0, %1, %cst {dimension_numbers = #tpu.dot_dimension_numbers<[0], [0], [1], [1], [0, 1, 1, 1], [], []>} : vector<16x128xf32>, vector<16x128xf32>, vector<128x128xf32> -> vector<128x128xf32>
    %c0_i32 = arith.constant 0 : i32
    %3 = arith.cmpi eq, %arg1, %c0_i32 : i32
    %4 = arith.extui %3 : i1 to i32
    %c0_i32_3 = arith.constant 0 : i32
    %5 = arith.cmpi ne, %4, %c0_i32_3 : i32
    scf.if %5 {
      %c0_8 = arith.constant 0 : index
      %c0_9 = arith.constant 0 : index
      %12 = vector.load %arg5[%c0_8, %c0_9] : memref<128x128xf32, #tpu.memory_space<vmem>>, vector<128x128xf32>
      tpu.vector_store %arg5[%c0_8, %c0_9], %2 {strides = array<i32>} : memref<128x128xf32, #tpu.memory_space<vmem>>, vector<128x128xf32>,
    } else {
    }
    %c0_i32_4 = arith.constant 0 : i32
    %6 = arith.cmpi sgt, %arg1, %c0_i32_4 : i32
    %7 = arith.extui %6 : i1 to i32
    %c0_i32_5 = arith.constant 0 : i32
    %8 = arith.cmpi ne, %7, %c0_i32_5 : i32
    scf.if %8 {
      %c0_8 = arith.constant 0 : index
      %c0_9 = arith.constant 0 : index
      %12 = vector.load %arg5[%c0_8, %c0_9] : memref<128x128xf32, #tpu.memory_space<vmem>>, vector<128x128xf32>
      %13 = arith.addf %12, %2 : vector<128x128xf32>
      %c0_10 = arith.constant 0 : index
      %c0_11 = arith.constant 0 : index
      %14 = vector.load %arg5[%c0_10, %c0_11] : memref<128x128xf32, #tpu.memory_space<vmem>>, vector<128x128xf32>
      tpu.vector_store %arg5[%c0_10, %c0_11], %13 {strides = array<i32>} : memref<128x128xf32, #tpu.memory_space<vmem>>, vector<128x128xf32>,
    } else {
    }
    %c0_i32_6 = arith.constant 0 : i32
    %9 = arith.cmpi eq, %arg1, %c0_i32_6 : i32
    %10 = arith.extui %9 : i1 to i32
    %c0_i32_7 = arith.constant 0 : i32
    %11 = arith.cmpi ne, %10, %c0_i32_7 : i32
    scf.if %11 {
      %c0_8 = arith.constant 0 : index
      %c0_9 = arith.constant 0 : index
      %12 = vector.load %arg5[%c0_8, %c0_9] : memref<128x128xf32, #tpu.memory_space<vmem>>, vector<128x128xf32>
      %13 = arith.mulf %12, %12 : vector<128x128xf32>
      %14 = vector.shape_cast %13 : vector<128x128xf32> to vector<1x128x128xf32>
      %cst_10 = arith.constant dense<0.000000e+00> : vector<1xf32>
      %15 = vector.multi_reduction <add>, %14, %cst_10 [1, 2] : vector<1x128x128xf32> to vector<1xf32>
      %16 = vector.shape_cast %15 : vector<1xf32> to vector<1x1x1xf32>
      %17 = vector.extract %16[0, 0, 0] : f32 from vector<1x1x1xf32>
      %c128_i32 = arith.constant 128 : i32
      %18 = arith.muli %arg0, %c128_i32 : i32
      %19 = tpu.assume_multiple %18, 128 : i32
      %20 = arith.index_cast %19 : i32 to index
      %c0_11 = arith.constant 0 : index
      %21 = vector.load %arg5[%20, %c0_11] : memref<128x128xf32, #tpu.memory_space<vmem>>, vector<128x128xf32>
      %22 = tpu.iota {dimensions = array<i32: 0>} : vector<128x128xi32>
      %23 = tpu.iota {dimensions = array<i32: 1>} : vector<128x128xi32>
      %24 = arith.cmpi eq, %22, %23 : vector<128x128xi32>
      %25 = arith.extui %24 : vector<128x128xi1> to vector<128x128xi32>
      %26 = arith.sitofp %25 : vector<128x128xi32> to vector<128x128xf32>
      %27 = arith.mulf %21, %26 : vector<128x128xf32>
      %28 = vector.shape_cast %27 : vector<128x128xf32> to vector<1x128x128xf32>
      %cst_12 = arith.constant dense<0.000000e+00> : vector<1xf32>
      %29 = vector.multi_reduction <add>, %28, %cst_12 [1, 2] : vector<1x128x128xf32> to vector<1xf32>
      %30 = vector.shape_cast %29 : vector<1xf32> to vector<1x1x1xf32>
      %31 = vector.extract %30[0, 0, 0] : f32 from vector<1x1x1xf32>
      %32 = arith.mulf %21, %21 : vector<128x128xf32>
      %33 = arith.mulf %32, %26 : vector<128x128xf32>
      %34 = vector.shape_cast %33 : vector<128x128xf32> to vector<1x128x128xf32>
      %cst_13 = arith.constant dense<0.000000e+00> : vector<1xf32>
      %35 = vector.multi_reduction <add>, %34, %cst_13 [1, 2] : vector<1x128x128xf32> to vector<1xf32>
      %36 = vector.shape_cast %35 : vector<1xf32> to vector<1x1x1xf32>
      %37 = vector.extract %36[0, 0, 0] : f32 from vector<1x1x1xf32>
      %38 = tpu.iota {dimensions = array<i32: 2>} : vector<1x8x128xi32>
      %c0_i32_14 = arith.constant 0 : i32
      %39 = vector.broadcast %c0_i32_14 : i32 to vector<1x8x128xi32>
      %40 = arith.cmpi eq, %38, %39 : vector<1x8x128xi32>
      %c1_i32 = arith.constant 1 : i32
      %41 = vector.broadcast %c1_i32 : i32 to vector<1x8x128xi32>
      %42 = arith.cmpi eq, %38, %41 : vector<1x8x128xi32>
      %c2_i32 = arith.constant 2 : i32
      %43 = vector.broadcast %c2_i32 : i32 to vector<1x8x128xi32>
      %44 = arith.cmpi eq, %38, %43 : vector<1x8x128xi32>
      %cst_15 = arith.constant 0.000000e+00 : f32
      %45 = vector.broadcast %37 : f32 to vector<1x8x128xf32>
      %46 = vector.broadcast %cst_15 : f32 to vector<1x8x128xf32>
      %47 = arith.select %44, %45, %46 : vector<1x8x128xi1>, vector<1x8x128xf32>
      %48 = vector.broadcast %31 : f32 to vector<1x8x128xf32>
      %49 = arith.select %42, %48, %47 : vector<1x8x128xi1>, vector<1x8x128xf32>
      %50 = vector.broadcast %17 : f32 to vector<1x8x128xf32>
      %51 = arith.select %40, %50, %49 : vector<1x8x128xi1>, vector<1x8x128xf32>
      %c0_16 = arith.constant 0 : index
      %c0_17 = arith.constant 0 : index
      %c0_18 = arith.constant 0 : index
      %52 = vector.load %arg4[%c0_16, %c0_17, %c0_18] : memref<1x8x128xf32, #tpu.memory_space<vmem>>, vector<1x8x128xf32>
      tpu.vector_store %arg4[%c0_16, %c0_17, %c0_18], %51 {strides = array<i32>} : memref<1x8x128xf32, #tpu.memory_space<vmem>>, vector<1x8x128xf32>,
    } else {
    }
    return
  }
  func.func @transform_0(%arg0: i32, %arg1: i32) -> (i32, i32) {
    %c0_i32 = arith.constant 0 : i32
    %c0_i32_0 = arith.constant 0 : i32
    return %arg1, %c0_i32 : i32, i32
  }
  func.func @transform_1(%arg0: i32, %arg1: i32) -> (i32, i32) {
    %c0_i32 = arith.constant 0 : i32
    return %arg1, %arg0 : i32, i32
  }
  func.func @transform_2(%arg0: i32, %arg1: i32) -> (i32, i32, i32) {
    %c0_i32 = arith.constant 0 : i32
    %c0_i32_0 = arith.constant 0 : i32
    %c0_i32_1 = arith.constant 0 : i32
    return %arg0, %c0_i32, %c0_i32_0 : i32, i32, i32
  }
}

</mosaic_0001>

<llo_original>
// kernel: tpu_custom_call.1
$region0: #{tpu_custom_call.1}
  #allocation0 [shape = 'u32[]', space=smem, size = 0x4, offset = 0x4, fixed_abs, tag = 'smem constant byte address 0x4 - core index']
  #allocation1 [shape = 'u32[144,128]{1,0:T(1,128)}', space=vmem, size = 0x12000, scoped, tag = 'internal scratch']
  #allocation2 [shape = 'f32[128,128]{1,0:T(8,128)}', space=vmem, size = 0x10000, scoped, tag = 'scratch operand']
  %s0 = inlined_call_operand.hbm [shape: f32[16,128], index: 0, kind: input, shape index: {}]
  %s1 = inlined_call_operand.hbm [shape: f32[16,128], index: 1, kind: input, shape index: {}]
  %s2 = inlined_call_operand.hbm [shape: f32[1,8,128], index: 2, kind: output, shape index: {}]
  %s3 = sld [smem:[#allocation0]]
  $region38: #{tpu_custom_call.1} parent=0
    _
  %s5 = ssub.s32 1, %s3
  %s6 = scalar_select 0, %s5, %s3
  $region1: #{tpu_custom_call.1} parent=0
    #allocation3 [shape = 'u8[8192]{0}', space=vmem, size = 0x2000, scoped, tag = 'input window, operand 0, single buffered']
    #allocation4 [shape = 's32[1]{0}', space=sflag, size = 0x4, scoped, tag = 'scoped memory for tpu_custom_call.1']
    #allocation5 [shape = 's32[1]{0}', space=sflag, size = 0x4, scoped, tag = 'scoped memory for tpu_custom_call.1']
    #allocation6 [shape = 'u8[8192]{0}', space=vmem, size = 0x2000, scoped, tag = 'input window, operand 1, single buffered']
    #allocation7 [shape = 's32[1]{0}', space=sflag, size = 0x4, scoped, tag = 'scoped memory for tpu_custom_call.1']
    #allocation8 [shape = 'u8[4096]{0}', space=vmem, size = 0x1000, scoped, tag = 'output window, operand 0, single buffered']
    %7 = vsyncpa [#allocation4], 0
    %8 = vsyncpa [#allocation7], 0
    %9 = vsyncpa [#allocation5], 0
    // Predicated region
    $region2: #{tpu_custom_call.1} parent=1 // pred_check
      _
    $region3: #{tpu_custom_call.1} parent=1 // pred_check_branch
      %11 = sbr.rel (0) target = $region5
    $region4: #{tpu_custom_call.1} parent=1 // pred_region
      %s13 = ssub.s32 256, 256
      %14 = vsyncadd [#allocation4], %s13
      %s15 = sshll.u32 [#allocation3], 4
      %s16 = int_to_ptr.vmem [resolvable:$true] %s15
      %21 = dma.hbm_to_vmem [thread:$0]  %s0, 256, %s16, [#allocation4], 128, 128, 8
    $region5: #{tpu_custom_call.1} parent=1 // pred_fallthru
      _
    // Predicated region
    $region6: #{tpu_custom_call.1} parent=1 // pred_check
      _
    $region7: #{tpu_custom_call.1} parent=1 // pred_check_branch
      %23 = sbr.rel (0) target = $region9
    $region8: #{tpu_custom_call.1} parent=1 // pred_region
      %s25 = ssub.s32 256, 256
      %26 = vsyncadd [#allocation7], %s25
      %s27 = sshll.u32 [#allocation6], 4
      %s28 = int_to_ptr.vmem [resolvable:$true] %s27
      %33 = dma.hbm_to_vmem [thread:$0]  %s1, 256, %s28, [#allocation7], 128, 128, 8
    $region9: #{tpu_custom_call.1} parent=1 // pred_fallthru
      _
    // Predicated region
    $region10: #{tpu_custom_call.1} parent=1 // pred_check
      _
    $region11: #{tpu_custom_call.1} parent=1 // pred_check_branch
      %35 = sbr.rel (0) target = $region13
    $region12: #{tpu_custom_call.1} parent=1 // pred_region
      %36 = dma.done [#allocation4], 256
    $region13: #{tpu_custom_call.1} parent=1 // pred_fallthru
      _
    // Predicated region
    $region14: #{tpu_custom_call.1} parent=1 // pred_check
      _
    $region15: #{tpu_custom_call.1} parent=1 // pred_check_branch
      %38 = sbr.rel (0) target = $region17
    $region16: #{tpu_custom_call.1} parent=1 // pred_region
      %39 = dma.done [#allocation7], 256
    $region17: #{tpu_custom_call.1} parent=1 // pred_fallthru
      _
    %v40 = vld [vmem:[#allocation3] sm:$0xff]
    %v41 = vld [vmem:[#allocation3 + $0x8] sm:$0xff]
    %v42 = vld [vmem:[#allocation6] sm:$0xff]
    %v43 = vld [vmem:[#allocation6 + $0x8] sm:$0xff]
    %44 = vxpose.xlu0.b32.start [1/16] %v40, 128
    %45 = vxpose.xlu0.b32.cont [2/16] %v41, 128
    %46 = vxpose.xlu0.b32.cont [3/16] 0.0, 128
    %47 = vxpose.xlu0.b32.cont [4/16] 0.0, 128
    %48 = vxpose.xlu0.b32.cont [5/16] 0.0, 128
    %49 = vxpose.xlu0.b32.cont [6/16] 0.0, 128
    %50 = vxpose.xlu0.b32.cont [7/16] 0.0, 128
    %51 = vxpose.xlu0.b32.cont [8/16] 0.0, 128
    %52 = vxpose.xlu0.b32.cont [9/16] 0.0, 128
    %53 = vxpose.xlu0.b32.cont [10/16] 0.0, 128
    %54 = vxpose.xlu0.b32.cont [11/16] 0.0, 128
    %55 = vxpose.xlu0.b32.cont [12/16] 0.0, 128
    %56 = vxpose.xlu0.b32.cont [13/16] 0.0, 128
    %57 = vxpose.xlu0.b32.cont [14/16] 0.0, 128
    %58 = vxpose.xlu0.b32.cont [15/16] 0.0, 128
    %59 = vxpose.xlu0.b32.end [16/16] 0.0, 128
    %v60 = vpop.trf.xlu0
    %v61 = vpop.trf.xlu0
    %v62 = vpop.trf.xlu0
    %v63 = vpop.trf.xlu0
    %v64 = vpop.trf.xlu0
    %v65 = vpop.trf.xlu0
    %v66 = vpop.trf.xlu0
    %v67 = vpop.trf.xlu0
    %v68 = vpop.trf.xlu0
    %v69 = vpop.trf.xlu0
    %v70 = vpop.trf.xlu0
    %v71 = vpop.trf.xlu0
    %v72 = vpop.trf.xlu0
    %v73 = vpop.trf.xlu0
    %v74 = vpop.trf.xlu0
    %v75 = vpop.trf.xlu0
    %vm76 = vcmask 130048
    %v78 = vsel %vm76, %v60, 0
    %v81 = vsel %vm76, %v61, 0
    %v84 = vsel %vm76, %v62, 0
    %v87 = vsel %vm76, %v63, 0
    %v90 = vsel %vm76, %v64, 0
    %v93 = vsel %vm76, %v65, 0
    %v96 = vsel %vm76, %v66, 0
    %v99 = vsel %vm76, %v67, 0
    %v102 = vsel %vm76, %v68, 0
    %v105 = vsel %vm76, %v69, 0
    %v108 = vsel %vm76, %v70, 0
    %v111 = vsel %vm76, %v71, 0
    %v114 = vsel %vm76, %v72, 0
    %v117 = vsel %vm76, %v73, 0
    %v120 = vsel %vm76, %v74, 0
    %v123 = vsel %vm76, %v75, 0
    %125 = vmatprep.subr.mxu0 0.0
    %126 = vmatpush1.msra.mxu0 %v42
    %127 = vmatprep.subr.mxu0 0.0
    %128 = vmatpush1.msra.mxu0 %v43
    %129 = vmatprep.subr.mxu0 0.0
    %130 = vmatpush1.msra.mxu0 0.0
    %131 = vmatprep.subr.mxu0 0.0
    %132 = vmatpush1.msra.mxu0 0.0
    %133 = vmatprep.subr.mxu0 0.0
    %134 = vmatpush1.msra.mxu0 0.0
    %135 = vmatprep.subr.mxu0 0.0
    %136 = vmatpush1.msra.mxu0 0.0
    %137 = vmatprep.subr.mxu0 0.0
    %138 = vmatpush1.msra.mxu0 0.0
    %139 = vmatprep.subr.mxu0 0.0
    %140 = vmatpush1.msra.mxu0 0.0
    %141 = vmatprep.subr.mxu0 0.0
    %142 = vmatpush1.msra.mxu0 0.0
    %143 = vmatprep.subr.mxu0 0.0
    %144 = vmatpush1.msra.mxu0 0.0
    %145 = vmatprep.subr.mxu0 0.0
    %146 = vmatpush1.msra.mxu0 0.0
    %147 = vmatprep.subr.mxu0 0.0
    %148 = vmatpush1.msra.mxu0 0.0
    %149 = vmatprep.subr.mxu0 0.0
    %150 = vmatpush1.msra.mxu0 0.0
    %151 = vmatprep.subr.mxu0 0.0
    %152 = vmatpush1.msra.mxu0 0.0
    %153 = vmatprep.subr.mxu0 0.0
    %154 = vmatpush1.msra.mxu0 0.0
    %155 = vmatprep.subr.mxu0 0.0
    %156 = vmatpush1.msra.mxu0 0.0
    %157 = vmatprep.subr.mxu0 0.0
    %158 = vmatpush1.msra.mxu0 0.0
    %159 = vmatprep.subr.mxu0 0.0
    %160 = vmatpush1.msra.mxu0 0.0
    %161 = vmatprep.subr.mxu0 0.0
    %162 = vmatpush1.msra.mxu0 0.0
    %163 = vmatprep.subr.mxu0 0.0
    %164 = vmatpush1.msra.mxu0 0.0
    %165 = vmatprep.subr.mxu0 0.0
    %166 = vmatpush1.msra.mxu0 0.0
    %167 = vmatprep.subr.mxu0 0.0
    %168 = vmatpush1.msra.mxu0 0.0
    %169 = vmatprep.subr.mxu0 0.0
    %170 = vmatpush1.msra.mxu0 0.0
    %171 = vmatprep.subr.mxu0 0.0
    %172 = vmatpush1.msra.mxu0 0.0
    %173 = vmatprep.subr.mxu0 0.0
    %174 = vmatpush1.msra.mxu0 0.0
    %175 = vmatprep.subr.mxu0 0.0
    %176 = vmatpush1.msra.mxu0 0.0
    %177 = vmatprep.subr.mxu0 0.0
    %178 = vmatpush1.msra.mxu0 0.0
    %179 = vmatprep.subr.mxu0 0.0
    %180 = vmatpush1.msra.mxu0 0.0
    %181 = vmatprep.subr.mxu0 0.0
    %182 = vmatpush1.msra.mxu0 0.0
    %183 = vmatprep.subr.mxu0 0.0
    %184 = vmatpush1.msra.mxu0 0.0
    %185 = vmatprep.subr.mxu0 0.0
    %186 = vmatpush1.msra.mxu0 0.0
    %187 = vmatprep.subr.mxu0 0.0
    %188 = vmatpush1.msra.mxu0 0.0
    %189 = vmatprep.mubr.f32.mxu0 0.0
    %190 = vmatmul.mubr.f32.gmra.mrb[0].mxu0 %v78
    %v191 = vpop.f32.mrb[0].mxu0
    %v192 = vadd.f32 0.0, %v191
    %v193 = vpop.f32.mrb[0].mxu0
    %194 = vmatprep.mubr.f32.mxu0 0.0
    %195 = vmatmul.mubr.f32.gmra.mrb[0].mxu0 %v81
    %v196 = vpop.f32.mrb[0].mxu0
    %v197 = vadd.f32 0.0, %v196
    %v198 = vpop.f32.mrb[0].mxu0
    %199 = vmatprep.mubr.f32.mxu0 0.0
    %200 = vmatmul.mubr.f32.gmra.mrb[0].mxu0 %v84
    %v201 = vpop.f32.mrb[0].mxu0
    %v202 = vadd.f32 0.0, %v201
    %v203 = vpop.f32.mrb[0].mxu0
    %204 = vmatprep.mubr.f32.mxu0 0.0
    %205 = vmatmul.mubr.f32.gmra.mrb[0].mxu0 %v87
    %v206 = vpop.f32.mrb[0].mxu0
    %v207 = vadd.f32 0.0, %v206
    %v208 = vpop.f32.mrb[0].mxu0
    %209 = vmatprep.mubr.f32.mxu0 0.0
    %210 = vmatmul.mubr.f32.gmra.mrb[0].mxu0 %v90
    %v211 = vpop.f32.mrb[0].mxu0
    %v212 = vadd.f32 0.0, %v211
    %v213 = vpop.f32.mrb[0].mxu0
    %214 = vmatprep.mubr.f32.mxu0 0.0
    %215 = vmatmul.mubr.f32.gmra.mrb[0].mxu0 %v93
    %v216 = vpop.f32.mrb[0].mxu0
    %v217 = vadd.f32 0.0, %v216
    %v218 = vpop.f32.mrb[0].mxu0
    %219 = vmatprep.mubr.f32.mxu0 0.0
    %220 = vmatmul.mubr.f32.gmra.mrb[0].mxu0 %v96
    %v221 = vpop.f32.mrb[0].mxu0
    %v222 = vadd.f32 0.0, %v221
    %v223 = vpop.f32.mrb[0].mxu0
    %224 = vmatprep.mubr.f32.mxu0 0.0
    %225 = vmatmul.mubr.f32.gmra.mrb[0].mxu0 %v99
    %v226 = vpop.f32.mrb[0].mxu0
    %v227 = vadd.f32 0.0, %v226
    %v228 = vpop.f32.mrb[0].mxu0
    %229 = vmatprep.mubr.f32.mxu0 0.0
    %230 = vmatmul.mubr.f32.gmra.mrb[0].mxu0 %v102
    %v231 = vpop.f32.mrb[0].mxu0
    %v232 = vadd.f32 0.0, %v231
    %v233 = vpop.f32.mrb[0].mxu0
    %234 = vmatprep.mubr.f32.mxu0 0.0
    %235 = vmatmul.mubr.f32.gmra.mrb[0].mxu0 %v105
    %v236 = vpop.f32.mrb[0].mxu0
    %v237 = vadd.f32 0.0, %v236
    %v238 = vpop.f32.mrb[0].mxu0
    %239 = vmatprep.mubr.f32.mxu0 0.0
    %240 = vmatmul.mubr.f32.gmra.mrb[0].mxu0 %v108
    %v241 = vpop.f32.mrb[0].mxu0
    %v242 = vadd.f32 0.0, %v241
    %v243 = vpop.f32.mrb[0].mxu0
    %244 = vmatprep.mubr.f32.mxu0 0.0
    %245 = vmatmul.mubr.f32.gmra.mrb[0].mxu0 %v111
    %v246 = vpop.f32.mrb[0].mxu0
    %v247 = vadd.f32 0.0, %v246
    %v248 = vpop.f32.mrb[0].mxu0
    %249 = vmatprep.mubr.f32.mxu0 0.0
    %250 = vmatmul.mubr.f32.gmra.mrb[0].mxu0 %v114
    %v251 = vpop.f32.mrb[0].mxu0
    %v252 = vadd.f32 0.0, %v251
    %v253 = vpop.f32.mrb[0].mxu0
    %254 = vmatprep.mubr.f32.mxu0 0.0
    %255 = vmatmul.mubr.f32.gmra.mrb[0].mxu0 %v117
    %v256 = vpop.f32.mrb[0].mxu0
    %v257 = vadd.f32 0.0, %v256
    %v258 = vpop.f32.mrb[0].mxu0
    %259 = vmatprep.mubr.f32.mxu0 0.0
    %260 = vmatmul.mubr.f32.gmra.mrb[0].mxu0 %v120
    %v261 = vpop.f32.mrb[0].mxu0
    %v262 = vadd.f32 0.0, %v261
    %v263 = vpop.f32.mrb[0].mxu0
    %264 = vmatprep.mubr.f32.mxu0 0.0
    %265 = vmatmul.mubr.f32.gmra.mrb[0].mxu0 %v123
    %v266 = vpop.f32.mrb[0].mxu0
    %v267 = vadd.f32 0.0, %v266
    %v268 = vpop.f32.mrb[0].mxu0
    %269 = vdwg.mxu0
    %p270 = scmp.eq.s32.totalorder 0, 0
    // Predicated region
    $region18: #{tpu_custom_call.1} parent=1 // pred_check
      %p271 = pneg %p270
    $region19: #{tpu_custom_call.1} parent=1 // pred_check_branch
      %273 = sbr.rel (%p271) target = $region21
    $region20: #{tpu_custom_call.1} parent=1 // pred_region
      %274 = vst [vmem:[#allocation2] sm:$0xff] %v192
      %275 = vst [vmem:[#allocation2 + $0x8] sm:$0xff] %v197
      %276 = vst [vmem:[#allocation2 + $0x10] sm:$0xff] %v202
      %277 = vst [vmem:[#allocation2 + $0x18] sm:$0xff] %v207
      %278 = vst [vmem:[#allocation2 + $0x20] sm:$0xff] %v212
      %279 = vst [vmem:[#allocation2 + $0x28] sm:$0xff] %v217
      %280 = vst [vmem:[#allocation2 + $0x30] sm:$0xff] %v222
      %281 = vst [vmem:[#allocation2 + $0x38] sm:$0xff] %v227
      %282 = vst [vmem:[#allocation2 + $0x40] sm:$0xff] %v232
      %283 = vst [vmem:[#allocation2 + $0x48] sm:$0xff] %v237
      %284 = vst [vmem:[#allocation2 + $0x50] sm:$0xff] %v242
      %285 = vst [vmem:[#allocation2 + $0x58] sm:$0xff] %v247
      %286 = vst [vmem:[#allocation2 + $0x60] sm:$0xff] %v252
      %287 = vst [vmem:[#allocation2 + $0x68] sm:$0xff] %v257
      %288 = vst [vmem:[#allocation2 + $0x70] sm:$0xff] %v262
      %289 = vst [vmem:[#allocation2 + $0x78] sm:$0xff] %v267
    $region21: #{tpu_custom_call.1} parent=1 // pred_fallthru
      _
    %p290 = scmp.gt.s32.totalorder 0, 0
    // Predicated region
    $region22: #{tpu_custom_call.1} parent=1 // pred_check
      %p291 = pneg %p290
    $region23: #{tpu_custom_call.1} parent=1 // pred_check_branch
      %293 = sbr.rel (%p291) target = $region25
    $region24: #{tpu_custom_call.1} parent=1 // pred_region
      %v294 = vld [vmem:[#allocation2] sm:$0xff]
      %v295 = vld [vmem:[#allocation2 + $0x8] sm:$0xff]
      %v296 = vld [vmem:[#allocation2 + $0x10] sm:$0xff]
      %v297 = vld [vmem:[#allocation2 + $0x18] sm:$0xff]
      %v298 = vld [vmem:[#allocation2 + $0x20] sm:$0xff]
      %v299 = vld [vmem:[#allocation2 + $0x28] sm:$0xff]
      %v300 = vld [vmem:[#allocation2 + $0x30] sm:$0xff]
      %v301 = vld [vmem:[#allocation2 + $0x38] sm:$0xff]
      %v302 = vld [vmem:[#allocation2 + $0x40] sm:$0xff]
      %v303 = vld [vmem:[#allocation2 + $0x48] sm:$0xff]
      %v304 = vld [vmem:[#allocation2 + $0x50] sm:$0xff]
      %v305 = vld [vmem:[#allocation2 + $0x58] sm:$0xff]
      %v306 = vld [vmem:[#allocation2 + $0x60] sm:$0xff]
      %v307 = vld [vmem:[#allocation2 + $0x68] sm:$0xff]
      %v308 = vld [vmem:[#allocation2 + $0x70] sm:$0xff]
      %v309 = vld [vmem:[#allocation2 + $0x78] sm:$0xff]
      %v310 = vadd.f32 %v294, %v192
      %v311 = vadd.f32 %v295, %v197
      %v312 = vadd.f32 %v296, %v202
      %v313 = vadd.f32 %v297, %v207
      %v314 = vadd.f32 %v298, %v212
      %v315 = vadd.f32 %v299, %v217
      %v316 = vadd.f32 %v300, %v222
      %v317 = vadd.f32 %v301, %v227
      %v318 = vadd.f32 %v302, %v232
      %v319 = vadd.f32 %v303, %v237
      %v320 = vadd.f32 %v304, %v242
      %v321 = vadd.f32 %v305, %v247
      %v322 = vadd.f32 %v306, %v252
      %v323 = vadd.f32 %v307, %v257
      %v324 = vadd.f32 %v308, %v262
      %v325 = vadd.f32 %v309, %v267
      %326 = vst [vmem:[#allocation2] sm:$0xff] %v310
      %327 = vst [vmem:[#allocation2 + $0x8] sm:$0xff] %v311
      %328 = vst [vmem:[#allocation2 + $0x10] sm:$0xff] %v312
      %329 = vst [vmem:[#allocation2 + $0x18] sm:$0xff] %v313
      %330 = vst [vmem:[#allocation2 + $0x20] sm:$0xff] %v314
      %331 = vst [vmem:[#allocation2 + $0x28] sm:$0xff] %v315
      %332 = vst [vmem:[#allocation2 + $0x30] sm:$0xff] %v316
      %333 = vst [vmem:[#allocation2 + $0x38] sm:$0xff] %v317
      %334 = vst [vmem:[#allocation2 + $0x40] sm:$0xff] %v318
      %335 = vst [vmem:[#allocation2 + $0x48] sm:$0xff] %v319
      %336 = vst [vmem:[#allocation2 + $0x50] sm:$0xff] %v320
      %337 = vst [vmem:[#allocation2 + $0x58] sm:$0xff] %v321
      %338 = vst [vmem:[#allocation2 + $0x60] sm:$0xff] %v322
      %339 = vst [vmem:[#allocation2 + $0x68] sm:$0xff] %v323
      %340 = vst [vmem:[#allocation2 + $0x70] sm:$0xff] %v324
      %341 = vst [vmem:[#allocation2 + $0x78] sm:$0xff] %v325
    $region25: #{tpu_custom_call.1} parent=1 // pred_fallthru
      _
    // Predicated region
    $region26: #{tpu_custom_call.1} parent=1 // pred_check
      %p342 = pneg %p270
    $region27: #{tpu_custom_call.1} parent=1 // pred_check_branch
      %344 = sbr.rel (%p342) target = $region29
    $region28: #{tpu_custom_call.1} parent=1 // pred_region
      %v345 = vld [vmem:[#allocation2] sm:$0xff]
      %v346 = vld [vmem:[#allocation2 + $0x8] sm:$0xff]
      %v347 = vld [vmem:[#allocation2 + $0x10] sm:$0xff]
      %v348 = vld [vmem:[#allocation2 + $0x18] sm:$0xff]
      %v349 = vld [vmem:[#allocation2 + $0x20] sm:$0xff]
      %v350 = vld [vmem:[#allocation2 + $0x28] sm:$0xff]
      %v351 = vld [vmem:[#allocation2 + $0x30] sm:$0xff]
      %v352 = vld [vmem:[#allocation2 + $0x38] sm:$0xff]
      %v353 = vld [vmem:[#allocation2 + $0x40] sm:$0xff]
      %v354 = vld [vmem:[#allocation2 + $0x48] sm:$0xff]
      %v355 = vld [vmem:[#allocation2 + $0x50] sm:$0xff]
      %v356 = vld [vmem:[#allocation2 + $0x58] sm:$0xff]
      %v357 = vld [vmem:[#allocation2 + $0x60] sm:$0xff]
      %v358 = vld [vmem:[#allocation2 + $0x68] sm:$0xff]
      %v359 = vld [vmem:[#allocation2 + $0x70] sm:$0xff]
      %v360 = vld [vmem:[#allocation2 + $0x78] sm:$0xff]
      %v361 = vmul.f32 %v345, %v345
      %v362 = vmul.f32 %v346, %v346
      %v363 = vmul.f32 %v347, %v347
      %v364 = vmul.f32 %v348, %v348
      %v365 = vmul.f32 %v349, %v349
      %v366 = vmul.f32 %v350, %v350
      %v367 = vmul.f32 %v351, %v351
      %v368 = vmul.f32 %v352, %v352
      %v369 = vmul.f32 %v353, %v353
      %v370 = vmul.f32 %v354, %v354
      %v371 = vmul.f32 %v355, %v355
      %v372 = vmul.f32 %v356, %v356
      %v373 = vmul.f32 %v357, %v357
      %v374 = vmul.f32 %v358, %v358
      %v375 = vmul.f32 %v359, %v359
      %v376 = vmul.f32 %v360, %v360
      %v377 = vadd.f32 %v361, %v362
      %v378 = vadd.f32 %v377, %v363
      %v379 = vadd.f32 %v378, %v364
      %v380 = vadd.f32 %v379, %v365
      %v381 = vadd.f32 %v380, %v366
      %v382 = vadd.f32 %v381, %v367
      %v383 = vadd.f32 %v382, %v368
      %v384 = vadd.f32 %v383, %v369
      %v385 = vadd.f32 %v384, %v370
      %v386 = vadd.f32 %v385, %v371
      %v387 = vadd.f32 %v386, %v372
      %v388 = vadd.f32 %v387, %v373
      %v389 = vadd.f32 %v388, %v374
      %v390 = vadd.f32 %v389, %v375
      %v391 = vadd.f32 %v390, %v376
      %392 = vadd.xlane.f32.xlu0 %v391
      %v393 = vpop.xlane.xlu0 %392
      %v394 = vrot.slane %v393, 4
      %v395 = vadd.f32 %v393, %v394
      %v396 = vrot.slane %v395, 2
      %v397 = vadd.f32 %v395, %v396
      %v398 = vrot.slane %v397, 1
      %v399 = vadd.f32 %v397, %v398
      %s400 = vtos %v399
      %s401 = smul.u32 0, 128
      %s402 = scalar_lea.vmem [#allocation2], %s401
      %v403 = vld [vmem:[%s402] sm:$0xff]
      %v404 = vld [vmem:[%s402 + $0x8] sm:$0xff]
      %v405 = vld [vmem:[%s402 + $0x10] sm:$0xff]
      %v406 = vld [vmem:[%s402 + $0x18] sm:$0xff]
      %v407 = vld [vmem:[%s402 + $0x20] sm:$0xff]
      %v408 = vld [vmem:[%s402 + $0x28] sm:$0xff]
      %v409 = vld [vmem:[%s402 + $0x30] sm:$0xff]
      %v410 = vld [vmem:[%s402 + $0x38] sm:$0xff]
      %v411 = vld [vmem:[%s402 + $0x40] sm:$0xff]
      %v412 = vld [vmem:[%s402 + $0x48] sm:$0xff]
      %v413 = vld [vmem:[%s402 + $0x50] sm:$0xff]
      %v414 = vld [vmem:[%s402 + $0x58] sm:$0xff]
      %v415 = vld [vmem:[%s402 + $0x60] sm:$0xff]
      %v416 = vld [vmem:[%s402 + $0x68] sm:$0xff]
      %v417 = vld [vmem:[%s402 + $0x70] sm:$0xff]
      %v418 = vld [vmem:[%s402 + $0x78] sm:$0xff]
      %v419 = vlaneseq
      %v420 = vshrl.u32 %v419, 7
      %v421 = vadd.s32 %v420, 8
      %v422 = vadd.s32 %v420, 16
      %v423 = vadd.s32 %v420, 24
      %v424 = vadd.s32 %v420, 32
      %v425 = vadd.s32 %v420, 40
      %v426 = vadd.s32 %v420, 48
      %v427 = vadd.s32 %v420, 56
      %v428 = vadd.s32 %v420, 64
      %v429 = vadd.s32 %v420, 72
      %v430 = vadd.s32 %v420, 80
      %v431 = vadd.s32 %v420, 88
      %v432 = vadd.s32 %v420, 96
      %v433 = vadd.s32 %v420, 104
      %v434 = vadd.s32 %v420, 112
      %v435 = vadd.s32 %v420, 120
      %v436 = vlaneseq
      %v437 = vand.u32 %v436, 127
      %vm438 = vcmp.eq.s32.totalorder %v420, %v437
      %vm439 = vcmp.eq.s32.totalorder %v421, %v437
      %vm440 = vcmp.eq.s32.totalorder %v422, %v437
      %vm441 = vcmp.eq.s32.totalorder %v423, %v437
      %vm442 = vcmp.eq.s32.totalorder %v424, %v437
      %vm443 = vcmp.eq.s32.totalorder %v425, %v437
      %vm444 = vcmp.eq.s32.totalorder %v426, %v437
      %vm445 = vcmp.eq.s32.totalorder %v427, %v437
      %vm446 = vcmp.eq.s32.totalorder %v428, %v437
      %vm447 = vcmp.eq.s32.totalorder %v429, %v437
      %vm448 = vcmp.eq.s32.totalorder %v430, %v437
      %vm449 = vcmp.eq.s32.totalorder %v431, %v437
      %vm450 = vcmp.eq.s32.totalorder %v432, %v437
      %vm451 = vcmp.eq.s32.totalorder %v433, %v437
      %vm452 = vcmp.eq.s32.totalorder %v434, %v437
      %vm453 = vcmp.eq.s32.totalorder %v435, %v437
      %v454 = vsel %vm438, 1, 0
      %v455 = vsel %vm439, 1, 0
      %v456 = vsel %vm440, 1, 0
      %v457 = vsel %vm441, 1, 0
      %v458 = vsel %vm442, 1, 0
      %v459 = vsel %vm443, 1, 0
      %v460 = vsel %vm444, 1, 0
      %v461 = vsel %vm445, 1, 0
      %v462 = vsel %vm446, 1, 0
      %v463 = vsel %vm447, 1, 0
      %v464 = vsel %vm448, 1, 0
      %v465 = vsel %vm449, 1, 0
      %v466 = vsel %vm450, 1, 0
      %v467 = vsel %vm451, 1, 0
      %v468 = vsel %vm452, 1, 0
      %v469 = vsel %vm453, 1, 0
      %v470 = vcvt.s32.f32 %v454
      %v471 = vcvt.s32.f32 %v455
      %v472 = vcvt.s32.f32 %v456
      %v473 = vcvt.s32.f32 %v457
      %v474 = vcvt.s32.f32 %v458
      %v475 = vcvt.s32.f32 %v459
      %v476 = vcvt.s32.f32 %v460
      %v477 = vcvt.s32.f32 %v461
      %v478 = vcvt.s32.f32 %v462
      %v479 = vcvt.s32.f32 %v463
      %v480 = vcvt.s32.f32 %v464
      %v481 = vcvt.s32.f32 %v465
      %v482 = vcvt.s32.f32 %v466
      %v483 = vcvt.s32.f32 %v467
      %v484 = vcvt.s32.f32 %v468
      %v485 = vcvt.s32.f32 %v469
      %v486 = vmul.f32 %v403, %v470
      %v487 = vmul.f32 %v404, %v471
      %v488 = vmul.f32 %v405, %v472
      %v489 = vmul.f32 %v406, %v473
      %v490 = vmul.f32 %v407, %v474
      %v491 = vmul.f32 %v408, %v475
      %v492 = vmul.f32 %v409, %v476
      %v493 = vmul.f32 %v410, %v477
      %v494 = vmul.f32 %v411, %v478
      %v495 = vmul.f32 %v412, %v479
      %v496 = vmul.f32 %v413, %v480
      %v497 = vmul.f32 %v414, %v481
      %v498 = vmul.f32 %v415, %v482
      %v499 = vmul.f32 %v416, %v483
      %v500 = vmul.f32 %v417, %v484
      %v501 = vmul.f32 %v418, %v485
      %v502 = vadd.f32 %v486, %v487
      %v503 = vadd.f32 %v502, %v488
      %v504 = vadd.f32 %v503, %v489
      %v505 = vadd.f32 %v504, %v490
      %v506 = vadd.f32 %v505, %v491
      %v507 = vadd.f32 %v506, %v492
      %v508 = vadd.f32 %v507, %v493
      %v509 = vadd.f32 %v508, %v494
      %v510 = vadd.f32 %v509, %v495
      %v511 = vadd.f32 %v510, %v496
      %v512 = vadd.f32 %v511, %v497
      %v513 = vadd.f32 %v512, %v498
      %v514 = vadd.f32 %v513, %v499
      %v515 = vadd.f32 %v514, %v500
      %v516 = vadd.f32 %v515, %v501
      %517 = vadd.xlane.f32.xlu0 %v516
      %v518 = vpop.xlane.xlu0 %517
      %v519 = vrot.slane %v518, 4
      %v520 = vadd.f32 %v518, %v519
      %v521 = vrot.slane %v520, 2
      %v522 = vadd.f32 %v520, %v521
      %v523 = vrot.slane %v522, 1
      %v524 = vadd.f32 %v522, %v523
      %s525 = vtos %v524
      %v526 = vmul.f32 %v403, %v403
      %v527 = vmul.f32 %v404, %v404
      %v528 = vmul.f32 %v405, %v405
      %v529 = vmul.f32 %v406, %v406
      %v530 = vmul.f32 %v407, %v407
      %v531 = vmul.f32 %v408, %v408
      %v532 = vmul.f32 %v409, %v409
      %v533 = vmul.f32 %v410, %v410
      %v534 = vmul.f32 %v411, %v411
      %v535 = vmul.f32 %v412, %v412
      %v536 = vmul.f32 %v413, %v413
      %v537 = vmul.f32 %v414, %v414
      %v538 = vmul.f32 %v415, %v415
      %v539 = vmul.f32 %v416, %v416
      %v540 = vmul.f32 %v417, %v417
      %v541 = vmul.f32 %v418, %v418
      %v542 = vmul.f32 %v526, %v470
      %v543 = vmul.f32 %v527, %v471
      %v544 = vmul.f32 %v528, %v472
      %v545 = vmul.f32 %v529, %v473
      %v546 = vmul.f32 %v530, %v474
      %v547 = vmul.f32 %v531, %v475
      %v548 = vmul.f32 %v532, %v476
      %v549 = vmul.f32 %v533, %v477
      %v550 = vmul.f32 %v534, %v478
      %v551 = vmul.f32 %v535, %v479
      %v552 = vmul.f32 %v536, %v480
      %v553 = vmul.f32 %v537, %v481
      %v554 = vmul.f32 %v538, %v482
      %v555 = vmul.f32 %v539, %v483
      %v556 = vmul.f32 %v540, %v484
      %v557 = vmul.f32 %v541, %v485
      %v558 = vadd.f32 %v542, %v543
      %v559 = vadd.f32 %v558, %v544
      %v560 = vadd.f32 %v559, %v545
      %v561 = vadd.f32 %v560, %v546
      %v562 = vadd.f32 %v561, %v547
      %v563 = vadd.f32 %v562, %v548
      %v564 = vadd.f32 %v563, %v549
      %v565 = vadd.f32 %v564, %v550
      %v566 = vadd.f32 %v565, %v551
      %v567 = vadd.f32 %v566, %v552
      %v568 = vadd.f32 %v567, %v553
      %v569 = vadd.f32 %v568, %v554
      %v570 = vadd.f32 %v569, %v555
      %v571 = vadd.f32 %v570, %v556
      %v572 = vadd.f32 %v571, %v557
      %573 = vadd.xlane.f32.xlu0 %v572
      %v574 = vpop.xlane.xlu0 %573
      %v575 = vrot.slane %v574, 4
      %v576 = vadd.f32 %v574, %v575
      %v577 = vrot.slane %v576, 2
      %v578 = vadd.f32 %v576, %v577
      %v579 = vrot.slane %v578, 1
      %v580 = vadd.f32 %v578, %v579
      %s581 = vtos %v580
      %vm582 = vcmp.eq.s32.totalorder %v437, 0
      %vm583 = vcmp.eq.s32.totalorder %v437, 1
      %vm584 = vcmp.eq.s32.totalorder %v437, 2
      %v585 = vstv %s581
      %v586 = vsel %vm584, %v585, 0.0
      %v587 = vstv %s525
      %v588 = vsel %vm583, %v587, %v586
      %v589 = vstv %s400
      %v590 = vsel %vm582, %v589, %v588
      %591 = vst [vmem:[#allocation8] sm:$0xff] %v590
    $region29: #{tpu_custom_call.1} parent=1 // pred_fallthru
      _
    // Predicated region
    $region30: #{tpu_custom_call.1} parent=1 // pred_check
      _
    $region31: #{tpu_custom_call.1} parent=1 // pred_check_branch
      %593 = sbr.rel (0) target = $region33
    $region32: #{tpu_custom_call.1} parent=1 // pred_region
      %s595 = ssub.s32 128, 128
      %596 = vsyncadd [#allocation5], %s595
      %s598 = sshll.u32 [#allocation8], 4
      %s599 = int_to_ptr.vmem [resolvable:$true] %s598
      %601 = dma.vmem_to_hbm [thread:$0]  %s599, 128, %s2, [#allocation5]
    $region33: #{tpu_custom_call.1} parent=1 // pred_fallthru
      _
    // Predicated region
    $region34: #{tpu_custom_call.1} parent=1 // pred_check
      _
    $region35: #{tpu_custom_call.1} parent=1 // pred_check_branch
      %603 = sbr.rel (0) target = $region37
    $region36: #{tpu_custom_call.1} parent=1 // pred_region
      %604 = dma.done [#allocation5], 128
    $region37: #{tpu_custom_call.1} parent=1 // pred_fallthru
      _
    %605 = vsyncpa [#allocation4], 1
    %606 = vsyncpa [#allocation7], 1
    %607 = vsyncpa [#allocation5], 1

</llo_original>
